<compile_context>
chip_gen: v6e
topology: v6e:2x2x1
jax: 0.10.0
libtpu: 0.0.40
codegen_flags: <defaults>
</compile_context>

<pallas_src>
import jax
import jax.numpy as jnp
from jax import lax
from jax.experimental import pallas as pl
from jax.experimental.pallas import tpu as pltpu

VOCAB = 512      # synthetic vocab size (deterministic init, no checkpoint load)
HIDDEN = 128     # hidden size (lane-aligned)
TOKEN_BLOCK = 128  # tokens per grid step; multiple of 8 keeps output tiles vreg-dense


def _embed_kernel(ids_ref, table_ref, out_ref):
    # ids_ref:   (T, 1) int32 token ids for this block (VMEM)
    # table_ref: (VOCAB, HIDDEN) embedding table, VMEM-resident across the grid
    # out_ref:   (T, HIDDEN) gathered embeddings
    ids = ids_ref[...]                                        # (T, 1)
    t = ids.shape[0]
    vocab = table_ref.shape[0]
    # One-hot gather routed onto the MXU: exact (0/1 weights), lane/sublane dense.
    iota = lax.broadcasted_iota(jnp.int32, (t, vocab), 1)     # (T, VOCAB)
    one_hot = (iota == ids).astype(table_ref.dtype)           # broadcast over lanes
    out_ref[...] = jnp.dot(
        one_hot, table_ref[...], preferred_element_type=jnp.float32
    ).astype(out_ref.dtype)


def _embedding_lookup(flat_ids, table, *, token_block=TOKEN_BLOCK):
    n_tokens = flat_ids.shape[0]
    vocab, hidden = table.shape

    n_blocks = pl.cdiv(n_tokens, token_block)
    n_pad = n_blocks * token_block
    # Pad the token axis to a whole number of blocks (padding ids = 0, sliced off below).
    ids2d = jnp.pad(flat_ids, (0, n_pad - n_tokens)).reshape(n_pad, 1)

    grid_spec = pltpu.PrefetchScalarGridSpec(
        num_scalar_prefetch=0,
        grid=(n_blocks,),
        in_specs=[
            # Per-block token ids: (T, 1); last dim equals full array dim, T % 8 == 0.
            pl.BlockSpec((token_block, 1), lambda i: (i, 0)),
            # Full table, constant block index => DMA'd once and held in VMEM.
            pl.BlockSpec((vocab, hidden), lambda i: (0, 0)),
        ],
        out_specs=pl.BlockSpec((token_block, hidden), lambda i: (i, 0)),
    )

    out = pl.pallas_call(
        _embed_kernel,
        grid_spec=grid_spec,
        out_shape=jax.ShapeDtypeStruct((n_pad, hidden), table.dtype),
        compiler_params=pltpu.CompilerParams(
            # Independent token blocks: lets v7x shard across its 2 TensorCores.
            dimension_semantics=("parallel",),
        ),
    )(ids2d, table)
    return out[:n_tokens]


def embedding_forward(input_ids, table):
    """Equivalent of Embedding.forward(input_ids) -> transformer.embed_tokens(input_ids)."""
    b, s = input_ids.shape
    vocab, hidden = table.shape
    flat = input_ids.reshape(-1).astype(jnp.int32)
    # nn.Embedding raises on out-of-range ids; clamp so the kernel never reads OOB.
    # TODO(synk): surface an explicit error for out-of-range ids instead of clamping.
    flat = jnp.clip(flat, 0, vocab - 1)
    out = _embedding_lookup(flat, table)
    return out.reshape(b, s, hidden)


if __name__ == "__main__":
    key = jax.random.PRNGKey(0)
    k_tab, k_ids = jax.random.split(key)

    # Deterministic synthetic embedding table (stands in for embed_tokens.weight).
    table = jax.random.normal(k_tab, (VOCAB, HIDDEN), dtype=jnp.float32)
    # Small input: batch=2, seq=8
    input_ids = jax.random.randint(k_ids, (2, 8), 0, VOCAB, dtype=jnp.int32)

    out = embedding_forward(input_ids, table)
    out = jax.block_until_ready(out)

    # Reference: plain JAX gather (== torch nn.Embedding forward).
    # NOTE: at shapes this small the XLA gather baseline wins on launch overhead;
    # the Pallas kernel targets the large-batch / fused-with-downstream case.
    ref = table[input_ids]
    assert out.shape == (2, 8, HIDDEN), out.shape
    assert out.dtype == table.dtype
    assert jnp.allclose(out, ref), "mismatch vs reference gather"

    print("KERNEL_OK")
</pallas_src>

<mosaic_0001>
module attributes {stable_mosaic.version = 11 : i64} {
  func.func @_embed_kernel(%arg0: i32, %arg1: memref<128x1xi32, #tpu.memory_space<vmem>>, %arg2: memref<512x128xf32, #tpu.memory_space<vmem>>, %arg3: memref<128x128xf32, #tpu.memory_space<vmem>>) attributes {dimension_semantics = [#tpu.dimension_semantics<parallel>], iteration_bounds = array<i64: 1>, scalar_prefetch = 0 : i64, scratch_operands = 0 : i64, tpu.core_type = #tpu.core_type<tc>, window_params = [{transform_indices = @transform_0, window_bounds = array<i64: 128, 1>}, {pipeline_mode = #tpu.pipeline_mode<synchronous>, transform_indices = @transform_1, window_bounds = array<i64: 512, 128>}, {transform_indices = @transform_2, window_bounds = array<i64: 128, 128>}]} {
    %c0 = arith.constant 0 : index
    %c0_0 = arith.constant 0 : index
    %0 = vector.load %arg1[%c0, %c0_0] : memref<128x1xi32, #tpu.memory_space<vmem>>, vector<128x1xi32>
    %1 = tpu.iota {dimensions = array<i32: 1>} : vector<128x512xi32>
    %2 = vector.broadcast %0 : vector<128x1xi32> to vector<128x512xi32>
    %3 = arith.cmpi eq, %1, %2 : vector<128x512xi32>
    %4 = arith.extui %3 : vector<128x512xi1> to vector<128x512xi32>
    %5 = arith.sitofp %4 : vector<128x512xi32> to vector<128x512xf32>
    %c0_1 = arith.constant 0 : index
    %c0_2 = arith.constant 0 : index
    %6 = vector.load %arg2[%c0_1, %c0_2] : memref<512x128xf32, #tpu.memory_space<vmem>>, vector<512x128xf32>
    %cst = arith.constant dense<0.000000e+00> : vector<128x128xf32>
    %7 = tpu.matmul %5, %6, %cst {dimension_numbers = #tpu.dot_dimension_numbers<[1], [0], [0], [1], [0, 0, 1, 1], [], []>} : vector<128x512xf32>, vector<512x128xf32>, vector<128x128xf32> -> vector<128x128xf32>
    %c0_3 = arith.constant 0 : index
    %c0_4 = arith.constant 0 : index
    %8 = vector.load %arg3[%c0_3, %c0_4] : memref<128x128xf32, #tpu.memory_space<vmem>>, vector<128x128xf32>
    tpu.vector_store %arg3[%c0_3, %c0_4], %7 {strides = array<i32>} : memref<128x128xf32, #tpu.memory_space<vmem>>, vector<128x128xf32>,
    return
  }
  func.func @transform_0(%arg0: i32) -> (i32, i32) {
    %c0_i32 = arith.constant 0 : i32
    %c0_i32_0 = arith.constant 0 : i32
    return %arg0, %c0_i32 : i32, i32
  }
  func.func @transform_1(%arg0: i32) -> (i32, i32) {
    %c0_i32 = arith.constant 0 : i32
    %c0_i32_0 = arith.constant 0 : i32
    %c0_i32_1 = arith.constant 0 : i32
    return %c0_i32, %c0_i32_0 : i32, i32
  }
  func.func @transform_2(%arg0: i32) -> (i32, i32) {
    %c0_i32 = arith.constant 0 : i32
    %c0_i32_0 = arith.constant 0 : i32
    return %arg0, %c0_i32 : i32, i32
  }
}

</mosaic_0001>

<llo_original>
// kernel: tpu_custom_call.1
$region0: #{tpu_custom_call.1}
  #allocation0 [shape = 'u32[]', space=smem, size = 0x4, offset = 0x4, fixed_abs, tag = 'smem constant byte address 0x4 - core index']
  #allocation1 [shape = 'u32[144,128]{1,0:T(1,128)}', space=vmem, size = 0x12000, scoped, tag = 'internal scratch']
  %s0 = inlined_call_operand.vmem [shape: s32[128,1], index: 0, kind: input, shape index: {}]
  %s1 = inlined_call_operand.hbm [shape: f32[512,128], index: 1, kind: input, shape index: {}]
  %s2 = inlined_call_operand.hbm [shape: f32[128,128], index: 2, kind: output, shape index: {}]
  %s3 = sld [smem:[#allocation0]]
  $region22: #{tpu_custom_call.1} parent=0
    _
  %s5 = ssub.s32 1, %s3
  %s6 = scalar_select 0, %s5, %s3
  $region1: #{tpu_custom_call.1} parent=0
    #allocation2 [shape = 'u8[262144]{0}', space=vmem, size = 0x40000, scoped, tag = 'input window, operand 1, single buffered']
    #allocation3 [shape = 's32[1]{0}', space=sflag, size = 0x4, scoped, tag = 'scoped memory for tpu_custom_call.1']
    #allocation4 [shape = 's32[1]{0}', space=sflag, size = 0x4, scoped, tag = 'scoped memory for tpu_custom_call.1']
    #allocation5 [shape = 'u8[65536]{0}', space=vmem, size = 0x10000, scoped, tag = 'output window, operand 0, single buffered']
    %7 = vsyncpa [#allocation3], 0
    %8 = vsyncpa [#allocation4], 0
    // Predicated region
    $region2: #{tpu_custom_call.1} parent=1 // pred_check
      _
    $region3: #{tpu_custom_call.1} parent=1 // pred_check_branch
      %10 = sbr.rel (0) target = $region5
    $region4: #{tpu_custom_call.1} parent=1 // pred_region
      _
    $region5: #{tpu_custom_call.1} parent=1 // pred_fallthru
      _
    // Predicated region
    $region6: #{tpu_custom_call.1} parent=1 // pred_check
      _
    $region7: #{tpu_custom_call.1} parent=1 // pred_check_branch
      %12 = sbr.rel (0) target = $region9
    $region8: #{tpu_custom_call.1} parent=1 // pred_region
      %s14 = ssub.s32 8192, 8192
      %15 = vsyncadd [#allocation3], %s14
      %s16 = sshll.u32 [#allocation2], 4
      %s17 = int_to_ptr.vmem [resolvable:$true] %s16
      %22 = dma.hbm_to_vmem [thread:$0]  %s1, 8192, %s17, [#allocation3], 128, 128, 8
    $region9: #{tpu_custom_call.1} parent=1 // pred_fallthru
      _
    // Predicated region
    $region10: #{tpu_custom_call.1} parent=1 // pred_check
      _
    $region11: #{tpu_custom_call.1} parent=1 // pred_check_branch
      %24 = sbr.rel (0) target = $region13
    $region12: #{tpu_custom_call.1} parent=1 // pred_region
      %25 = dma.done [#allocation3], 8192
    $region13: #{tpu_custom_call.1} parent=1 // pred_fallthru
      _
    %v26 = vld [vmem:[%s0] sm:$0xff]
    %v27 = vld [vmem:[%s0 + $0x8] sm:$0xff]
    %v28 = vld [vmem:[%s0 + $0x10] sm:$0xff]
    %v29 = vld [vmem:[%s0 + $0x18] sm:$0xff]
    %v30 = vld [vmem:[%s0 + $0x20] sm:$0xff]
    %v31 = vld [vmem:[%s0 + $0x28] sm:$0xff]
    %v32 = vld [vmem:[%s0 + $0x30] sm:$0xff]
    %v33 = vld [vmem:[%s0 + $0x38] sm:$0xff]
    %v34 = vld [vmem:[%s0 + $0x40] sm:$0xff]
    %v35 = vld [vmem:[%s0 + $0x48] sm:$0xff]
    %v36 = vld [vmem:[%s0 + $0x50] sm:$0xff]
    %v37 = vld [vmem:[%s0 + $0x58] sm:$0xff]
    %v38 = vld [vmem:[%s0 + $0x60] sm:$0xff]
    %v39 = vld [vmem:[%s0 + $0x68] sm:$0xff]
    %v40 = vld [vmem:[%s0 + $0x70] sm:$0xff]
    %v41 = vld [vmem:[%s0 + $0x78] sm:$0xff]
    %v42 = vlaneseq
    %v43 = vand.u32 %v42, 127
    %v44 = vadd.s32 %v43, 128
    %v45 = vadd.s32 %v43, 256
    %v46 = vadd.s32 %v43, 384
    %47 = vset.pattern.permute.xlu0 0
    %48 = vperm.xlu0 %47, %v26
    %v49 = vpop.permute.xlu0 %48
    %50 = vset.pattern.permute.xlu0 0
    %51 = vperm.xlu0 %50, %v27
    %v52 = vpop.permute.xlu0 %51
    %53 = vset.pattern.permute.xlu0 0
    %54 = vperm.xlu0 %53, %v28
    %v55 = vpop.permute.xlu0 %54
    %56 = vset.pattern.permute.xlu0 0
    %57 = vperm.xlu0 %56, %v29
    %v58 = vpop.permute.xlu0 %57
    %59 = vset.pattern.permute.xlu0 0
    %60 = vperm.xlu0 %59, %v30
    %v61 = vpop.permute.xlu0 %60
    %62 = vset.pattern.permute.xlu0 0
    %63 = vperm.xlu0 %62, %v31
    %v64 = vpop.permute.xlu0 %63
    %65 = vset.pattern.permute.xlu0 0
    %66 = vperm.xlu0 %65, %v32
    %v67 = vpop.permute.xlu0 %66
    %68 = vset.pattern.permute.xlu0 0
    %69 = vperm.xlu0 %68, %v33
    %v70 = vpop.permute.xlu0 %69
    %71 = vset.pattern.permute.xlu0 0
    %72 = vperm.xlu0 %71, %v34
    %v73 = vpop.permute.xlu0 %72
    %74 = vset.pattern.permute.xlu0 0
    %75 = vperm.xlu0 %74, %v35
    %v76 = vpop.permute.xlu0 %75
    %77 = vset.pattern.permute.xlu0 0
    %78 = vperm.xlu0 %77, %v36
    %v79 = vpop.permute.xlu0 %78
    %80 = vset.pattern.permute.xlu0 0
    %81 = vperm.xlu0 %80, %v37
    %v82 = vpop.permute.xlu0 %81
    %83 = vset.pattern.permute.xlu0 0
    %84 = vperm.xlu0 %83, %v38
    %v85 = vpop.permute.xlu0 %84
    %86 = vset.pattern.permute.xlu0 0
    %87 = vperm.xlu0 %86, %v39
    %v88 = vpop.permute.xlu0 %87
    %89 = vset.pattern.permute.xlu0 0
    %90 = vperm.xlu0 %89, %v40
    %v91 = vpop.permute.xlu0 %90
    %92 = vset.pattern.permute.xlu0 0
    %93 = vperm.xlu0 %92, %v41
    %v94 = vpop.permute.xlu0 %93
    %vm95 = vcmp.eq.s32.totalorder %v43, %v49
    %vm96 = vcmp.eq.s32.totalorder %v44, %v49
    %vm97 = vcmp.eq.s32.totalorder %v45, %v49
    %vm98 = vcmp.eq.s32.totalorder %v46, %v49
    %vm99 = vcmp.eq.s32.totalorder %v43, %v52
    %vm100 = vcmp.eq.s32.totalorder %v44, %v52
    %vm101 = vcmp.eq.s32.totalorder %v45, %v52
    %vm102 = vcmp.eq.s32.totalorder %v46, %v52
    %vm103 = vcmp.eq.s32.totalorder %v43, %v55
    %vm104 = vcmp.eq.s32.totalorder %v44, %v55
    %vm105 = vcmp.eq.s32.totalorder %v45, %v55
    %vm106 = vcmp.eq.s32.totalorder %v46, %v55
    %vm107 = vcmp.eq.s32.totalorder %v43, %v58
    %vm108 = vcmp.eq.s32.totalorder %v44, %v58
    %vm109 = vcmp.eq.s32.totalorder %v45, %v58
    %vm110 = vcmp.eq.s32.totalorder %v46, %v58
    %vm111 = vcmp.eq.s32.totalorder %v43, %v61
    %vm112 = vcmp.eq.s32.totalorder %v44, %v61
    %vm113 = vcmp.eq.s32.totalorder %v45, %v61
    %vm114 = vcmp.eq.s32.totalorder %v46, %v61
    %vm115 = vcmp.eq.s32.totalorder %v43, %v64
    %vm116 = vcmp.eq.s32.totalorder %v44, %v64
    %vm117 = vcmp.eq.s32.totalorder %v45, %v64
    %vm118 = vcmp.eq.s32.totalorder %v46, %v64
    %vm119 = vcmp.eq.s32.totalorder %v43, %v67
    %vm120 = vcmp.eq.s32.totalorder %v44, %v67
    %vm121 = vcmp.eq.s32.totalorder %v45, %v67
    %vm122 = vcmp.eq.s32.totalorder %v46, %v67
    %vm123 = vcmp.eq.s32.totalorder %v43, %v70
    %vm124 = vcmp.eq.s32.totalorder %v44, %v70
    %vm125 = vcmp.eq.s32.totalorder %v45, %v70
    %vm126 = vcmp.eq.s32.totalorder %v46, %v70
    %vm127 = vcmp.eq.s32.totalorder %v43, %v73
    %vm128 = vcmp.eq.s32.totalorder %v44, %v73
    %vm129 = vcmp.eq.s32.totalorder %v45, %v73
    %vm130 = vcmp.eq.s32.totalorder %v46, %v73
    %vm131 = vcmp.eq.s32.totalorder %v43, %v76
    %vm132 = vcmp.eq.s32.totalorder %v44, %v76
    %vm133 = vcmp.eq.s32.totalorder %v45, %v76
    %vm134 = vcmp.eq.s32.totalorder %v46, %v76
    %vm135 = vcmp.eq.s32.totalorder %v43, %v79
    %vm136 = vcmp.eq.s32.totalorder %v44, %v79
    %vm137 = vcmp.eq.s32.totalorder %v45, %v79
    %vm138 = vcmp.eq.s32.totalorder %v46, %v79
    %vm139 = vcmp.eq.s32.totalorder %v43, %v82
    %vm140 = vcmp.eq.s32.totalorder %v44, %v82
    %vm141 = vcmp.eq.s32.totalorder %v45, %v82
    %vm142 = vcmp.eq.s32.totalorder %v46, %v82
    %vm143 = vcmp.eq.s32.totalorder %v43, %v85
    %vm144 = vcmp.eq.s32.totalorder %v44, %v85
    %vm145 = vcmp.eq.s32.totalorder %v45, %v85
    %vm146 = vcmp.eq.s32.totalorder %v46, %v85
    %vm147 = vcmp.eq.s32.totalorder %v43, %v88
    %vm148 = vcmp.eq.s32.totalorder %v44, %v88
    %vm149 = vcmp.eq.s32.totalorder %v45, %v88
    %vm150 = vcmp.eq.s32.totalorder %v46, %v88
    %vm151 = vcmp.eq.s32.totalorder %v43, %v91
    %vm152 = vcmp.eq.s32.totalorder %v44, %v91
    %vm153 = vcmp.eq.s32.totalorder %v45, %v91
    %vm154 = vcmp.eq.s32.totalorder %v46, %v91
    %vm155 = vcmp.eq.s32.totalorder %v43, %v94
    %vm156 = vcmp.eq.s32.totalorder %v44, %v94
    %vm157 = vcmp.eq.s32.totalorder %v45, %v94
    %vm158 = vcmp.eq.s32.totalorder %v46, %v94
    %v159 = vsel %vm95, 1, 0
    %v160 = vsel %vm96, 1, 0
    %v161 = vsel %vm97, 1, 0
    %v162 = vsel %vm98, 1, 0
    %v163 = vsel %vm99, 1, 0
    %v164 = vsel %vm100, 1, 0
    %v165 = vsel %vm101, 1, 0
    %v166 = vsel %vm102, 1, 0
    %v167 = vsel %vm103, 1, 0
    %v168 = vsel %vm104, 1, 0
    %v169 = vsel %vm105, 1, 0
    %v170 = vsel %vm106, 1, 0
    %v171 = vsel %vm107, 1, 0
    %v172 = vsel %vm108, 1, 0
    %v173 = vsel %vm109, 1, 0
    %v174 = vsel %vm110, 1, 0
    %v175 = vsel %vm111, 1, 0
    %v176 = vsel %vm112, 1, 0
    %v177 = vsel %vm113, 1, 0
    %v178 = vsel %vm114, 1, 0
    %v179 = vsel %vm115, 1, 0
    %v180 = vsel %vm116, 1, 0
    %v181 = vsel %vm117, 1, 0
    %v182 = vsel %vm118, 1, 0
    %v183 = vsel %vm119, 1, 0
    %v184 = vsel %vm120, 1, 0
    %v185 = vsel %vm121, 1, 0
    %v186 = vsel %vm122, 1, 0
    %v187 = vsel %vm123, 1, 0
    %v188 = vsel %vm124, 1, 0
    %v189 = vsel %vm125, 1, 0
    %v190 = vsel %vm126, 1, 0
    %v191 = vsel %vm127, 1, 0
    %v192 = vsel %vm128, 1, 0
    %v193 = vsel %vm129, 1, 0
    %v194 = vsel %vm130, 1, 0
    %v195 = vsel %vm131, 1, 0
    %v196 = vsel %vm132, 1, 0
    %v197 = vsel %vm133, 1, 0
    %v198 = vsel %vm134, 1, 0
    %v199 = vsel %vm135, 1, 0
    %v200 = vsel %vm136, 1, 0
    %v201 = vsel %vm137, 1, 0
    %v202 = vsel %vm138, 1, 0
    %v203 = vsel %vm139, 1, 0
    %v204 = vsel %vm140, 1, 0
    %v205 = vsel %vm141, 1, 0
    %v206 = vsel %vm142, 1, 0
    %v207 = vsel %vm143, 1, 0
    %v208 = vsel %vm144, 1, 0
    %v209 = vsel %vm145, 1, 0
    %v210 = vsel %vm146, 1, 0
    %v211 = vsel %vm147, 1, 0
    %v212 = vsel %vm148, 1, 0
    %v213 = vsel %vm149, 1, 0
    %v214 = vsel %vm150, 1, 0
    %v215 = vsel %vm151, 1, 0
    %v216 = vsel %vm152, 1, 0
    %v217 = vsel %vm153, 1, 0
    %v218 = vsel %vm154, 1, 0
    %v219 = vsel %vm155, 1, 0
    %v220 = vsel %vm156, 1, 0
    %v221 = vsel %vm157, 1, 0
    %v222 = vsel %vm158, 1, 0
    %v223 = vcvt.s32.f32 %v159
    %v224 = vcvt.s32.f32 %v160
    %v225 = vcvt.s32.f32 %v161
    %v226 = vcvt.s32.f32 %v162
    %v227 = vcvt.s32.f32 %v163
    %v228 = vcvt.s32.f32 %v164
    %v229 = vcvt.s32.f32 %v165
    %v230 = vcvt.s32.f32 %v166
    %v231 = vcvt.s32.f32 %v167
    %v232 = vcvt.s32.f32 %v168
    %v233 = vcvt.s32.f32 %v169
    %v234 = vcvt.s32.f32 %v170
    %v235 = vcvt.s32.f32 %v171
    %v236 = vcvt.s32.f32 %v172
    %v237 = vcvt.s32.f32 %v173
    %v238 = vcvt.s32.f32 %v174
    %v239 = vcvt.s32.f32 %v175
    %v240 = vcvt.s32.f32 %v176
    %v241 = vcvt.s32.f32 %v177
    %v242 = vcvt.s32.f32 %v178
    %v243 = vcvt.s32.f32 %v179
    %v244 = vcvt.s32.f32 %v180
    %v245 = vcvt.s32.f32 %v181
    %v246 = vcvt.s32.f32 %v182
    %v247 = vcvt.s32.f32 %v183
    %v248 = vcvt.s32.f32 %v184
    %v249 = vcvt.s32.f32 %v185
    %v250 = vcvt.s32.f32 %v186
    %v251 = vcvt.s32.f32 %v187
    %v252 = vcvt.s32.f32 %v188
    %v253 = vcvt.s32.f32 %v189
    %v254 = vcvt.s32.f32 %v190
    %v255 = vcvt.s32.f32 %v191
    %v256 = vcvt.s32.f32 %v192
    %v257 = vcvt.s32.f32 %v193
    %v258 = vcvt.s32.f32 %v194
    %v259 = vcvt.s32.f32 %v195
    %v260 = vcvt.s32.f32 %v196
    %v261 = vcvt.s32.f32 %v197
    %v262 = vcvt.s32.f32 %v198
    %v263 = vcvt.s32.f32 %v199
    %v264 = vcvt.s32.f32 %v200
    %v265 = vcvt.s32.f32 %v201
    %v266 = vcvt.s32.f32 %v202
    %v267 = vcvt.s32.f32 %v203
    %v268 = vcvt.s32.f32 %v204
    %v269 = vcvt.s32.f32 %v205
    %v270 = vcvt.s32.f32 %v206
    %v271 = vcvt.s32.f32 %v207
    %v272 = vcvt.s32.f32 %v208
    %v273 = vcvt.s32.f32 %v209
    %v274 = vcvt.s32.f32 %v210
    %v275 = vcvt.s32.f32 %v211
    %v276 = vcvt.s32.f32 %v212
    %v277 = vcvt.s32.f32 %v213
    %v278 = vcvt.s32.f32 %v214
    %v279 = vcvt.s32.f32 %v215
    %v280 = vcvt.s32.f32 %v216
    %v281 = vcvt.s32.f32 %v217
    %v282 = vcvt.s32.f32 %v218
    %v283 = vcvt.s32.f32 %v219
    %v284 = vcvt.s32.f32 %v220
    %v285 = vcvt.s32.f32 %v221
    %v286 = vcvt.s32.f32 %v222
    %v287 = vld [vmem:[#allocation2] sm:$0xff]
    %v288 = vld [vmem:[#allocation2 + $0x8] sm:$0xff]
    %v289 = vld [vmem:[#allocation2 + $0x10] sm:$0xff]
    %v290 = vld [vmem:[#allocation2 + $0x18] sm:$0xff]
    %v291 = vld [vmem:[#allocation2 + $0x20] sm:$0xff]
    %v292 = vld [vmem:[#allocation2 + $0x28] sm:$0xff]
    %v293 = vld [vmem:[#allocation2 + $0x30] sm:$0xff]
    %v294 = vld [vmem:[#allocation2 + $0x38] sm:$0xff]
    %v295 = vld [vmem:[#allocation2 + $0x40] sm:$0xff]
    %v296 = vld [vmem:[#allocation2 + $0x48] sm:$0xff]
    %v297 = vld [vmem:[#allocation2 + $0x50] sm:$0xff]
    %v298 = vld [vmem:[#allocation2 + $0x58] sm:$0xff]
    %v299 = vld [vmem:[#allocation2 + $0x60] sm:$0xff]
    %v300 = vld [vmem:[#allocation2 + $0x68] sm:$0xff]
    %v301 = vld [vmem:[#allocation2 + $0x70] sm:$0xff]
    %v302 = vld [vmem:[#allocation2 + $0x78] sm:$0xff]
    %v303 = vld [vmem:[#allocation2 + $0x80] sm:$0xff]
    %v304 = vld [vmem:[#allocation2 + $0x88] sm:$0xff]
    %v305 = vld [vmem:[#allocation2 + $0x90] sm:$0xff]
    %v306 = vld [vmem:[#allocation2 + $0x98] sm:$0xff]
    %v307 = vld [vmem:[#allocation2 + $0xa0] sm:$0xff]
    %v308 = vld [vmem:[#allocation2 + $0xa8] sm:$0xff]
    %v309 = vld [vmem:[#allocation2 + $0xb0] sm:$0xff]
    %v310 = vld [vmem:[#allocation2 + $0xb8] sm:$0xff]
    %v311 = vld [vmem:[#allocation2 + $0xc0] sm:$0xff]
    %v312 = vld [vmem:[#allocation2 + $0xc8] sm:$0xff]
    %v313 = vld [vmem:[#allocation2 + $0xd0] sm:$0xff]
    %v314 = vld [vmem:[#allocation2 + $0xd8] sm:$0xff]
    %v315 = vld [vmem:[#allocation2 + $0xe0] sm:$0xff]
    %v316 = vld [vmem:[#allocation2 + $0xe8] sm:$0xff]
    %v317 = vld [vmem:[#allocation2 + $0xf0] sm:$0xff]
    %v318 = vld [vmem:[#allocation2 + $0xf8] sm:$0xff]
    %v319 = vld [vmem:[#allocation2 + $0x100] sm:$0xff]
    %v320 = vld [vmem:[#allocation2 + $0x108] sm:$0xff]
    %v321 = vld [vmem:[#allocation2 + $0x110] sm:$0xff]
    %v322 = vld [vmem:[#allocation2 + $0x118] sm:$0xff]
    %v323 = vld [vmem:[#allocation2 + $0x120] sm:$0xff]
    %v324 = vld [vmem:[#allocation2 + $0x128] sm:$0xff]
    %v325 = vld [vmem:[#allocation2 + $0x130] sm:$0xff]
    %v326 = vld [vmem:[#allocation2 + $0x138] sm:$0xff]
    %v327 = vld [vmem:[#allocation2 + $0x140] sm:$0xff]
    %v328 = vld [vmem:[#allocation2 + $0x148] sm:$0xff]
    %v329 = vld [vmem:[#allocation2 + $0x150] sm:$0xff]
    %v330 = vld [vmem:[#allocation2 + $0x158] sm:$0xff]
    %v331 = vld [vmem:[#allocation2 + $0x160] sm:$0xff]
    %v332 = vld [vmem:[#allocation2 + $0x168] sm:$0xff]
    %v333 = vld [vmem:[#allocation2 + $0x170] sm:$0xff]
    %v334 = vld [vmem:[#allocation2 + $0x178] sm:$0xff]
    %v335 = vld [vmem:[#allocation2 + $0x180] sm:$0xff]
    %v336 = vld [vmem:[#allocation2 + $0x188] sm:$0xff]
    %v337 = vld [vmem:[#allocation2 + $0x190] sm:$0xff]
    %v338 = vld [vmem:[#allocation2 + $0x198] sm:$0xff]
    %v339 = vld [vmem:[#allocation2 + $0x1a0] sm:$0xff]
    %v340 = vld [vmem:[#allocation2 + $0x1a8] sm:$0xff]
    %v341 = vld [vmem:[#allocation2 + $0x1b0] sm:$0xff]
    %v342 = vld [vmem:[#allocation2 + $0x1b8] sm:$0xff]
    %v343 = vld [vmem:[#allocation2 + $0x1c0] sm:$0xff]
    %v344 = vld [vmem:[#allocation2 + $0x1c8] sm:$0xff]
    %v345 = vld [vmem:[#allocation2 + $0x1d0] sm:$0xff]
    %v346 = vld [vmem:[#allocation2 + $0x1d8] sm:$0xff]
    %v347 = vld [vmem:[#allocation2 + $0x1e0] sm:$0xff]
    %v348 = vld [vmem:[#allocation2 + $0x1e8] sm:$0xff]
    %v349 = vld [vmem:[#allocation2 + $0x1f0] sm:$0xff]
    %v350 = vld [vmem:[#allocation2 + $0x1f8] sm:$0xff]
    %351 = vmatprep.subr.mxu0 0.0
    %352 = vmatpush1.msra.mxu0 %v302
    %353 = vmatprep.subr.mxu0 0.0
    %354 = vmatpush1.msra.mxu0 %v301
    %355 = vmatprep.subr.mxu0 0.0
    %356 = vmatpush1.msra.mxu0 %v300
    %357 = vmatprep.subr.mxu0 0.0
    %358 = vmatpush1.msra.mxu0 %v299
    %359 = vmatprep.subr.mxu0 0.0
    %360 = vmatpush1.msra.mxu0 %v298
    %361 = vmatprep.subr.mxu0 0.0
    %362 = vmatpush1.msra.mxu0 %v297
    %363 = vmatprep.subr.mxu0 0.0
    %364 = vmatpush1.msra.mxu0 %v296
    %365 = vmatprep.subr.mxu0 0.0
    %366 = vmatpush1.msra.mxu0 %v295
    %367 = vmatprep.subr.mxu0 0.0
    %368 = vmatpush1.msra.mxu0 %v294
    %369 = vmatprep.subr.mxu0 0.0
    %370 = vmatpush1.msra.mxu0 %v293
    %371 = vmatprep.subr.mxu0 0.0
    %372 = vmatpush1.msra.mxu0 %v292
    %373 = vmatprep.subr.mxu0 0.0
    %374 = vmatpush1.msra.mxu0 %v291
    %375 = vmatprep.subr.mxu0 0.0
    %376 = vmatpush1.msra.mxu0 %v290
    %377 = vmatprep.subr.mxu0 0.0
    %378 = vmatpush1.msra.mxu0 %v289
    %379 = vmatprep.subr.mxu0 0.0
    %380 = vmatpush1.msra.mxu0 %v288
    %381 = vmatprep.subr.mxu0 0.0
    %382 = vmatpush1.msra.mxu0 %v287
    %383 = vmatprep.subr.mxu0 0.0
    %384 = vmatpush2.msra.mxu0 %v318
    %385 = vmatprep.subr.mxu0 0.0
    %386 = vmatpush2.msra.mxu0 %v317
    %387 = vmatprep.subr.mxu0 0.0
    %388 = vmatpush2.msra.mxu0 %v316
    %389 = vmatprep.subr.mxu0 0.0
    %390 = vmatpush2.msra.mxu0 %v315
    %391 = vmatprep.subr.mxu0 0.0
    %392 = vmatpush2.msra.mxu0 %v314
    %393 = vmatprep.subr.mxu0 0.0
    %394 = vmatpush2.msra.mxu0 %v313
    %395 = vmatprep.subr.mxu0 0.0
    %396 = vmatpush2.msra.mxu0 %v312
    %397 = vmatprep.subr.mxu0 0.0
    %398 = vmatpush2.msra.mxu0 %v311
    %399 = vmatprep.subr.mxu0 0.0
    %400 = vmatpush2.msra.mxu0 %v310
    %401 = vmatprep.subr.mxu0 0.0
    %402 = vmatpush2.msra.mxu0 %v309
    %403 = vmatprep.subr.mxu0 0.0
    %404 = vmatpush2.msra.mxu0 %v308
    %405 = vmatprep.subr.mxu0 0.0
    %406 = vmatpush2.msra.mxu0 %v307
    %407 = vmatprep.subr.mxu0 0.0
    %408 = vmatpush2.msra.mxu0 %v306
    %409 = vmatprep.subr.mxu0 0.0
    %410 = vmatpush2.msra.mxu0 %v305
    %411 = vmatprep.subr.mxu0 0.0
    %412 = vmatpush2.msra.mxu0 %v304
    %413 = vmatprep.subr.mxu0 0.0
    %414 = vmatpush2.msra.mxu0 %v303
    %415 = vmatprep.mubr.f32.mxu0 %v224
    %416 = vmatmul.mubr.f32.gmra.mxu0 %v223
    %v417 = vpop.f32.mrf.mxu0
    %v418 = vadd.f32 0.0, %v417
    %v419 = vpop.f32.mrf.mxu0
    %420 = vmatprep.mubr.f32.mxu0 %v228
    %421 = vmatmul.mubr.f32.gmra.mxu0 %v227
    %v422 = vpop.f32.mrf.mxu0
    %v423 = vadd.f32 0.0, %v422
    %v424 = vpop.f32.mrf.mxu0
    %425 = vmatprep.mubr.f32.mxu0 %v232
    %426 = vmatmul.mubr.f32.gmra.mxu0 %v231
    %v427 = vpop.f32.mrf.mxu0
    %v428 = vadd.f32 0.0, %v427
    %v429 = vpop.f32.mrf.mxu0
    %430 = vmatprep.mubr.f32.mxu0 %v236
    %431 = vmatmul.mubr.f32.gmra.mxu0 %v235
    %v432 = vpop.f32.mrf.mxu0
    %v433 = vadd.f32 0.0, %v432
    %v434 = vpop.f32.mrf.mxu0
    %435 = vmatprep.mubr.f32.mxu0 %v240
    %436 = vmatmul.mubr.f32.gmra.mxu0 %v239
    %v437 = vpop.f32.mrf.mxu0
    %v438 = vadd.f32 0.0, %v437
    %v439 = vpop.f32.mrf.mxu0
    %440 = vmatprep.mubr.f32.mxu0 %v244
    %441 = vmatmul.mubr.f32.gmra.mxu0 %v243
    %v442 = vpop.f32.mrf.mxu0
    %v443 = vadd.f32 0.0, %v442
    %v444 = vpop.f32.mrf.mxu0
    %445 = vmatprep.mubr.f32.mxu0 %v248
    %446 = vmatmul.mubr.f32.gmra.mxu0 %v247
    %v447 = vpop.f32.mrf.mxu0
    %v448 = vadd.f32 0.0, %v447
    %v449 = vpop.f32.mrf.mxu0
    %450 = vmatprep.mubr.f32.mxu0 %v252
    %451 = vmatmul.mubr.f32.gmra.mxu0 %v251
    %v452 = vpop.f32.mrf.mxu0
    %v453 = vadd.f32 0.0, %v452
    %v454 = vpop.f32.mrf.mxu0
    %455 = vmatprep.mubr.f32.mxu0 %v256
    %456 = vmatmul.mubr.f32.gmra.mxu0 %v255
    %v457 = vpop.f32.mrf.mxu0
    %v458 = vadd.f32 0.0, %v457
    %v459 = vpop.f32.mrf.mxu0
    %460 = vmatprep.mubr.f32.mxu0 %v260
    %461 = vmatmul.mubr.f32.gmra.mxu0 %v259
    %v462 = vpop.f32.mrf.mxu0
    %v463 = vadd.f32 0.0, %v462
    %v464 = vpop.f32.mrf.mxu0
    %465 = vmatprep.mubr.f32.mxu0 %v264
    %466 = vmatmul.mubr.f32.gmra.mxu0 %v263
    %v467 = vpop.f32.mrf.mxu0
    %v468 = vadd.f32 0.0, %v467
    %v469 = vpop.f32.mrf.mxu0
    %470 = vmatprep.mubr.f32.mxu0 %v268
    %471 = vmatmul.mubr.f32.gmra.mxu0 %v267
    %v472 = vpop.f32.mrf.mxu0
    %v473 = vadd.f32 0.0, %v472
    %v474 = vpop.f32.mrf.mxu0
    %475 = vmatprep.mubr.f32.mxu0 %v272
    %476 = vmatmul.mubr.f32.gmra.mxu0 %v271
    %v477 = vpop.f32.mrf.mxu0
    %v478 = vadd.f32 0.0, %v477
    %v479 = vpop.f32.mrf.mxu0
    %480 = vmatprep.mubr.f32.mxu0 %v276
    %481 = vmatmul.mubr.f32.gmra.mxu0 %v275
    %v482 = vpop.f32.mrf.mxu0
    %v483 = vadd.f32 0.0, %v482
    %v484 = vpop.f32.mrf.mxu0
    %485 = vmatprep.mubr.f32.mxu0 %v280
    %486 = vmatmul.mubr.f32.gmra.mxu0 %v279
    %v487 = vpop.f32.mrf.mxu0
    %v488 = vadd.f32 0.0, %v487
    %v489 = vpop.f32.mrf.mxu0
    %490 = vmatprep.mubr.f32.mxu0 %v284
    %491 = vmatmul.mubr.f32.gmra.mxu0 %v283
    %v492 = vpop.f32.mrf.mxu0
    %v493 = vadd.f32 0.0, %v492
    %v494 = vpop.f32.mrf.mxu0
    %495 = vdwg.mxu0
    %496 = vmatprep.subr.mxu0 0.0
    %497 = vmatpush1.msra.mxu0 %v334
    %498 = vmatprep.subr.mxu0 0.0
    %499 = vmatpush1.msra.mxu0 %v333
    %500 = vmatprep.subr.mxu0 0.0
    %501 = vmatpush1.msra.mxu0 %v332
    %502 = vmatprep.subr.mxu0 0.0
    %503 = vmatpush1.msra.mxu0 %v331
    %504 = vmatprep.subr.mxu0 0.0
    %505 = vmatpush1.msra.mxu0 %v330
    %506 = vmatprep.subr.mxu0 0.0
    %507 = vmatpush1.msra.mxu0 %v329
    %508 = vmatprep.subr.mxu0 0.0
    %509 = vmatpush1.msra.mxu0 %v328
    %510 = vmatprep.subr.mxu0 0.0
    %511 = vmatpush1.msra.mxu0 %v327
    %512 = vmatprep.subr.mxu0 0.0
    %513 = vmatpush1.msra.mxu0 %v326
    %514 = vmatprep.subr.mxu0 0.0
    %515 = vmatpush1.msra.mxu0 %v325
    %516 = vmatprep.subr.mxu0 0.0
    %517 = vmatpush1.msra.mxu0 %v324
    %518 = vmatprep.subr.mxu0 0.0
    %519 = vmatpush1.msra.mxu0 %v323
    %520 = vmatprep.subr.mxu0 0.0
    %521 = vmatpush1.msra.mxu0 %v322
    %522 = vmatprep.subr.mxu0 0.0
    %523 = vmatpush1.msra.mxu0 %v321
    %524 = vmatprep.subr.mxu0 0.0
    %525 = vmatpush1.msra.mxu0 %v320
    %526 = vmatprep.subr.mxu0 0.0
    %527 = vmatpush1.msra.mxu0 %v319
    %528 = vmatprep.subr.mxu0 0.0
    %529 = vmatpush2.msra.mxu0 %v350
    %530 = vmatprep.subr.mxu0 0.0
    %531 = vmatpush2.msra.mxu0 %v349
    %532 = vmatprep.subr.mxu0 0.0
    %533 = vmatpush2.msra.mxu0 %v348
    %534 = vmatprep.subr.mxu0 0.0
    %535 = vmatpush2.msra.mxu0 %v347
    %536 = vmatprep.subr.mxu0 0.0
    %537 = vmatpush2.msra.mxu0 %v346
    %538 = vmatprep.subr.mxu0 0.0
    %539 = vmatpush2.msra.mxu0 %v345
    %540 = vmatprep.subr.mxu0 0.0
    %541 = vmatpush2.msra.mxu0 %v344
    %542 = vmatprep.subr.mxu0 0.0
    %543 = vmatpush2.msra.mxu0 %v343
    %544 = vmatprep.subr.mxu0 0.0
    %545 = vmatpush2.msra.mxu0 %v342
    %546 = vmatprep.subr.mxu0 0.0
    %547 = vmatpush2.msra.mxu0 %v341
    %548 = vmatprep.subr.mxu0 0.0
    %549 = vmatpush2.msra.mxu0 %v340
    %550 = vmatprep.subr.mxu0 0.0
    %551 = vmatpush2.msra.mxu0 %v339
    %552 = vmatprep.subr.mxu0 0.0
    %553 = vmatpush2.msra.mxu0 %v338
    %554 = vmatprep.subr.mxu0 0.0
    %555 = vmatpush2.msra.mxu0 %v337
    %556 = vmatprep.subr.mxu0 0.0
    %557 = vmatpush2.msra.mxu0 %v336
    %558 = vmatprep.subr.mxu0 0.0
    %559 = vmatpush2.msra.mxu0 %v335
    %560 = vmatprep.mubr.f32.mxu0 %v226
    %561 = vmatmul.mubr.f32.gmra.mxu0 %v225
    %v562 = vpop.f32.mrf.mxu0
    %v563 = vadd.f32 %v418, %v562
    %v564 = vpop.f32.mrf.mxu0
    %565 = vmatprep.mubr.f32.mxu0 %v230
    %566 = vmatmul.mubr.f32.gmra.mxu0 %v229
    %v567 = vpop.f32.mrf.mxu0
    %v568 = vadd.f32 %v423, %v567
    %v569 = vpop.f32.mrf.mxu0
    %570 = vmatprep.mubr.f32.mxu0 %v234
    %571 = vmatmul.mubr.f32.gmra.mxu0 %v233
    %v572 = vpop.f32.mrf.mxu0
    %v573 = vadd.f32 %v428, %v572
    %v574 = vpop.f32.mrf.mxu0
    %575 = vmatprep.mubr.f32.mxu0 %v238
    %576 = vmatmul.mubr.f32.gmra.mxu0 %v237
    %v577 = vpop.f32.mrf.mxu0
    %v578 = vadd.f32 %v433, %v577
    %v579 = vpop.f32.mrf.mxu0
    %580 = vmatprep.mubr.f32.mxu0 %v242
    %581 = vmatmul.mubr.f32.gmra.mxu0 %v241
    %v582 = vpop.f32.mrf.mxu0
    %v583 = vadd.f32 %v438, %v582
    %v584 = vpop.f32.mrf.mxu0
    %585 = vmatprep.mubr.f32.mxu0 %v246
    %586 = vmatmul.mubr.f32.gmra.mxu0 %v245
    %v587 = vpop.f32.mrf.mxu0
    %v588 = vadd.f32 %v443, %v587
    %v589 = vpop.f32.mrf.mxu0
    %590 = vmatprep.mubr.f32.mxu0 %v250
    %591 = vmatmul.mubr.f32.gmra.mxu0 %v249
    %v592 = vpop.f32.mrf.mxu0
    %v593 = vadd.f32 %v448, %v592
    %v594 = vpop.f32.mrf.mxu0
    %595 = vmatprep.mubr.f32.mxu0 %v254
    %596 = vmatmul.mubr.f32.gmra.mxu0 %v253
    %v597 = vpop.f32.mrf.mxu0
    %v598 = vadd.f32 %v453, %v597
    %v599 = vpop.f32.mrf.mxu0
    %600 = vmatprep.mubr.f32.mxu0 %v258
    %601 = vmatmul.mubr.f32.gmra.mxu0 %v257
    %v602 = vpop.f32.mrf.mxu0
    %v603 = vadd.f32 %v458, %v602
    %v604 = vpop.f32.mrf.mxu0
    %605 = vmatprep.mubr.f32.mxu0 %v262
    %606 = vmatmul.mubr.f32.gmra.mxu0 %v261
    %v607 = vpop.f32.mrf.mxu0
    %v608 = vadd.f32 %v463, %v607
    %v609 = vpop.f32.mrf.mxu0
    %610 = vmatprep.mubr.f32.mxu0 %v266
    %611 = vmatmul.mubr.f32.gmra.mxu0 %v265
    %v612 = vpop.f32.mrf.mxu0
    %v613 = vadd.f32 %v468, %v612
    %v614 = vpop.f32.mrf.mxu0
    %615 = vmatprep.mubr.f32.mxu0 %v270
    %616 = vmatmul.mubr.f32.gmra.mxu0 %v269
    %v617 = vpop.f32.mrf.mxu0
    %v618 = vadd.f32 %v473, %v617
    %v619 = vpop.f32.mrf.mxu0
    %620 = vmatprep.mubr.f32.mxu0 %v274
    %621 = vmatmul.mubr.f32.gmra.mxu0 %v273
    %v622 = vpop.f32.mrf.mxu0
    %v623 = vadd.f32 %v478, %v622
    %v624 = vpop.f32.mrf.mxu0
    %625 = vmatprep.mubr.f32.mxu0 %v278
    %626 = vmatmul.mubr.f32.gmra.mxu0 %v277
    %v627 = vpop.f32.mrf.mxu0
    %v628 = vadd.f32 %v483, %v627
    %v629 = vpop.f32.mrf.mxu0
    %630 = vmatprep.mubr.f32.mxu0 %v282
    %631 = vmatmul.mubr.f32.gmra.mxu0 %v281
    %v632 = vpop.f32.mrf.mxu0
    %v633 = vadd.f32 %v488, %v632
    %v634 = vpop.f32.mrf.mxu0
    %635 = vmatprep.mubr.f32.mxu0 %v286
    %636 = vmatmul.mubr.f32.gmra.mxu0 %v285
    %v637 = vpop.f32.mrf.mxu0
    %v638 = vadd.f32 %v493, %v637
    %v639 = vpop.f32.mrf.mxu0
    %640 = vdwg.mxu0
    %641 = vst [vmem:[#allocation5] sm:$0xff] %v563
    %642 = vst [vmem:[#allocation5 + $0x8] sm:$0xff] %v568
    %643 = vst [vmem:[#allocation5 + $0x10] sm:$0xff] %v573
    %644 = vst [vmem:[#allocation5 + $0x18] sm:$0xff] %v578
    %645 = vst [vmem:[#allocation5 + $0x20] sm:$0xff] %v583
    %646 = vst [vmem:[#allocation5 + $0x28] sm:$0xff] %v588
    %647 = vst [vmem:[#allocation5 + $0x30] sm:$0xff] %v593
    %648 = vst [vmem:[#allocation5 + $0x38] sm:$0xff] %v598
    %649 = vst [vmem:[#allocation5 + $0x40] sm:$0xff] %v603
    %650 = vst [vmem:[#allocation5 + $0x48] sm:$0xff] %v608
    %651 = vst [vmem:[#allocation5 + $0x50] sm:$0xff] %v613
    %652 = vst [vmem:[#allocation5 + $0x58] sm:$0xff] %v618
    %653 = vst [vmem:[#allocation5 + $0x60] sm:$0xff] %v623
    %654 = vst [vmem:[#allocation5 + $0x68] sm:$0xff] %v628
    %655 = vst [vmem:[#allocation5 + $0x70] sm:$0xff] %v633
    %656 = vst [vmem:[#allocation5 + $0x78] sm:$0xff] %v638
    // Predicated region
    $region14: #{tpu_custom_call.1} parent=1 // pred_check
      _
    $region15: #{tpu_custom_call.1} parent=1 // pred_check_branch
      %658 = sbr.rel (0) target = $region17
    $region16: #{tpu_custom_call.1} parent=1 // pred_region
      %s660 = ssub.s32 2048, 2048
      %661 = vsyncadd [#allocation4], %s660
      %s662 = sshll.u32 [#allocation5], 4
      %s663 = int_to_ptr.vmem [resolvable:$true] %s662
      %668 = dma.vmem_to_hbm [thread:$0]  %s663, 2048, %s2, [#allocation4], 128, 128, 8
    $region17: #{tpu_custom_call.1} parent=1 // pred_fallthru
      _
    // Predicated region
    $region18: #{tpu_custom_call.1} parent=1 // pred_check
      _
    $region19: #{tpu_custom_call.1} parent=1 // pred_check_branch
      %670 = sbr.rel (0) target = $region21
    $region20: #{tpu_custom_call.1} parent=1 // pred_region
      %671 = dma.done [#allocation4], 2048
    $region21: #{tpu_custom_call.1} parent=1 // pred_fallthru
      _
    %672 = vsyncpa [#allocation3], 1
    %673 = vsyncpa [#allocation4], 1

</llo_original>
